<compile_context>
chip_gen: v7x
topology: tpu7x:2x2x1
jax: 0.10.0
libtpu: 0.0.40
codegen_flags: <defaults>
</compile_context>

<pallas_src>
import functools

import jax
import jax.numpy as jnp
from jax.experimental import pallas as pl
from jax.experimental.pallas import tpu as pltpu


def _ce2d_kernel(*refs, hw, t_split, has_weight):
    """One grid step: a (1, C, TILE_HW) probability block + (1, 1, TILE_HW) targets."""
    if has_weight:
        p_ref, t_ref, w_ref, o_loss_ref, o_w_ref, acc_loss, acc_w = refs
    else:
        p_ref, t_ref, o_loss_ref, acc_loss = refs
        w_ref = o_w_ref = acc_w = None

    s = pl.program_id(1)          # pixel-split index (megacore-parallel)
    j = pl.program_id(2)          # pixel-tile index within the split (reduction axis)

    @pl.when(j == 0)
    def _():
        acc_loss[...] = jnp.zeros_like(acc_loss)
        if has_weight:
            acc_w[...] = jnp.zeros_like(acc_w)

    p = p_ref[0].astype(jnp.float32)      # (C, TILE_HW) probabilities
    t = t_ref[0]                          # (1, TILE_HW) int32 targets
    C, tile_hw = p.shape

    # One-hot of the target class along the channel (sublane) axis, then select
    # the target probability so log only runs on 1/C of the elements.
    cls = jax.lax.broadcasted_iota(jnp.int32, (C, tile_hw), 0)
    onehot = (cls == t).astype(jnp.float32)                    # (C, TILE_HW)
    p_tgt = jnp.sum(onehot * p, axis=0, keepdims=True)         # (1, TILE_HW)

    # Mask lanes past the end of the flattened H*W axis (ragged last tile).
    lane = jax.lax.broadcasted_iota(jnp.int32, (1, tile_hw), 1)
    base = (s * t_split + j) * tile_hw
    valid = (base + lane) < hw

    p_safe = jnp.where(valid, p_tgt, 1.0)        # padded lanes -> -log(1) = 0
    nll = -jnp.log(p_safe)                       # (1, TILE_HW)

    if has_weight:
        w = w_ref[...].astype(jnp.float32)                     # (C, 1)
        w_tgt = jnp.sum(onehot * w, axis=0, keepdims=True)     # (1, TILE_HW)
        w_tgt = jnp.where(valid, w_tgt, 0.0)
        acc_loss[...] += nll * w_tgt
        acc_w[...] += w_tgt
    else:
        acc_loss[...] += nll

    @pl.when(j == pl.num_programs(2) - 1)
    def _():
        o_loss_ref[0] = acc_loss[...]
        if has_weight:
            o_w_ref[0] = acc_w[...]


def _choose_tile_hw(C, HW, itemsize=4, target_bytes=4 << 20,
                    max_tile=131072, min_tile=512):
    """Pick a lane tile so one probability block is a few MiB (DMA-efficient)."""
    t = target_bytes // max(C * itemsize, 1)
    t = max(min(t, max_tile), min_tile)
    t = (t // 128) * 128
    if t >= HW:
        return HW          # single full-width block (full dim is always legal)
    return max(t, 128)


@functools.partial(jax.jit, static_argnames=("tile_hw", "nsplit"))
def cross_entropy_loss_2d(inputs_nchw, targets_nhw, weight=None, *,
                          tile_hw=None, nsplit=2):
    """Pallas implementation of CrossEntropyLoss2d.forward (size_average=True).

    inputs_nchw: (N, C, H, W) float probabilities.
    targets_nhw: (N, H, W) integer class indices in [0, C).
    weight:      optional (C,) per-class weights (None -> unweighted mean).
    Returns a scalar f32 loss.
    """
    N, C, H, W = inputs_nchw.shape
    HW = H * W
    has_weight = weight is not None

    # Free reshapes only: no NCHW->NHWC transpose, no padding concatenate.
    p = inputs_nchw.reshape(N, C, HW)
    t = targets_nhw.reshape(N, 1, HW).astype(jnp.int32)

    if tile_hw is None:
        tile_hw = _choose_tile_hw(C, HW, itemsize=jnp.dtype(p.dtype).itemsize)
    n_tiles = pl.cdiv(HW, tile_hw)

    # Megacore split over pixel tiles (only a divisor of n_tiles, so every
    # block index stays in range; N is also a parallel axis).
    nsplit = max(1, min(int(nsplit), n_tiles))
    while n_tiles % nsplit != 0:
        nsplit -= 1
    t_split = n_tiles // nsplit

    p_spec = pl.BlockSpec((1, C, tile_hw), lambda n, s, j: (n, 0, s * t_split + j))
    t_spec = pl.BlockSpec((1, 1, tile_hw), lambda n, s, j: (n, 0, s * t_split + j))
    o_spec = pl.BlockSpec((1, 1, tile_hw), lambda n, s, j: (n, s, 0))
    partial_shape = jax.ShapeDtypeStruct((N, nsplit, tile_hw), jnp.float32)

    in_specs = [p_spec, t_spec]
    operands = [p, t]
    out_shape = partial_shape
    out_specs = o_spec
    scratch = [pltpu.VMEM((1, tile_hw), jnp.float32)]
    if has_weight:
        w = jnp.asarray(weight, jnp.float32).reshape(C, 1)
        in_specs.append(pl.BlockSpec((C, 1), lambda n, s, j: (0, 0)))
        operands.append(w)
        out_shape = (partial_shape, partial_shape)
        out_specs = (o_spec, o_spec)
        scratch.append(pltpu.VMEM((1, tile_hw), jnp.float32))

    kernel = functools.partial(_ce2d_kernel, hw=HW, t_split=t_split,
                               has_weight=has_weight)

    out = pl.pallas_call(
        kernel,
        out_shape=out_shape,
        grid_spec=pltpu.PrefetchScalarGridSpec(
            num_scalar_prefetch=0,
            grid=(N, nsplit, t_split),
            in_specs=in_specs,
            out_specs=out_specs,
            scratch_shapes=scratch,
        ),
        compiler_params=pltpu.CompilerParams(
            dimension_semantics=("parallel", "parallel", "arbitrary"),
            vmem_limit_bytes=32 * 1024 * 1024,
        ),
    )(*operands)

    if has_weight:
        out_loss, out_w = out
        return jnp.sum(out_loss) / jnp.sum(out_w)
    # Unweighted: divide by the statically known pixel count (size_average=True).
    return jnp.sum(out) / jnp.float32(N * HW)


def _reference(inputs_nchw, targets_nhw, weight=None):
    """Pure-JAX reference of NLLLoss2d(log(inputs), targets), size_average=True."""
    N, C, H, W = inputs_nchw.shape
    t = targets_nhw.astype(jnp.int32)
    p_tgt = jnp.take_along_axis(inputs_nchw, t[:, None, :, :], axis=1)[:, 0]  # (N,H,W)
    w = jnp.ones((C,), jnp.float32) if weight is None else jnp.asarray(weight, jnp.float32)
    wmap = w[t]                                                               # (N,H,W)
    return jnp.sum(-jnp.log(p_tgt) * wmap) / jnp.sum(wmap)


if __name__ == "__main__":
    key = jax.random.PRNGKey(0)
    k1, k2, k3, k4, k5 = jax.random.split(key, 5)

    # Primary test: N=2, C=4, 16x16.
    N, C, H, W = 2, 4, 16, 16
    logits = jax.random.normal(k1, (N, C, H, W), jnp.float32)
    probs = jax.nn.softmax(logits, axis=1)
    targets = jax.random.randint(k2, (N, H, W), 0, C, jnp.int32)

    loss = jax.block_until_ready(cross_entropy_loss_2d(probs, targets))
    ref = _reference(probs, targets)
    assert jnp.allclose(loss, ref, rtol=1e-5, atol=1e-5), (loss, ref)

    # Multi-tile / split path (forced small tile, HW divisible by tile).
    loss2 = jax.block_until_ready(
        cross_entropy_loss_2d(probs, targets, tile_hw=128, nsplit=2))
    assert jnp.allclose(loss2, ref, rtol=1e-5, atol=1e-5), (loss2, ref)

    # Ragged tail path: H*W not a multiple of the tile -> in-kernel mask.
    H2, W2 = 16, 20
    logits_r = jax.random.normal(k3, (N, C, H2, W2), jnp.float32)
    probs_r = jax.nn.softmax(logits_r, axis=1)
    targets_r = jax.random.randint(k4, (N, H2, W2), 0, C, jnp.int32)
    loss_r = jax.block_until_ready(
        cross_entropy_loss_2d(probs_r, targets_r, tile_hw=128, nsplit=2))
    ref_r = _reference(probs_r, targets_r)
    assert jnp.allclose(loss_r, ref_r, rtol=1e-5, atol=1e-5), (loss_r, ref_r)

    # Weighted path.
    wvec = jax.random.uniform(k5, (C,), jnp.float32, 0.5, 1.5)
    loss_w = jax.block_until_ready(cross_entropy_loss_2d(probs, targets, wvec))
    ref_w = _reference(probs, targets, wvec)
    assert jnp.allclose(loss_w, ref_w, rtol=1e-5, atol=1e-5), (loss_w, ref_w)

    print("KERNEL_OK")
</pallas_src>

<mosaic_0001>
module attributes {stable_mosaic.version = 11 : i64} {
  func.func @_ce2d_kernel(%arg0: i32, %arg1: i32, %arg2: i32, %arg3: memref<1x4x256xf32, #tpu.memory_space<vmem>>, %arg4: memref<1x1x256xi32, #tpu.memory_space<vmem>>, %arg5: memref<1x1x256xf32, #tpu.memory_space<vmem>>, %arg6: memref<1x256xf32, #tpu.memory_space<vmem>>) attributes {dimension_semantics = [#tpu.dimension_semantics<parallel>, #tpu.dimension_semantics<parallel>, #tpu.dimension_semantics<arbitrary>], iteration_bounds = array<i64: 2, 1, 1>, scalar_prefetch = 0 : i64, scratch_operands = 1 : i64, tpu.core_type = #tpu.core_type<tc>, window_params = [{transform_indices = @transform_0, window_bounds = array<i64: 1, 4, 256>}, {transform_indices = @transform_1, window_bounds = array<i64: 1, 1, 256>}, {transform_indices = @transform_2, window_bounds = array<i64: 1, 1, 256>}]} {
    %c0_i32 = arith.constant 0 : i32
    %0 = arith.cmpi eq, %arg2, %c0_i32 : i32
    %1 = arith.extui %0 : i1 to i32
    %c0_i32_0 = arith.constant 0 : i32
    %2 = arith.cmpi ne, %1, %c0_i32_0 : i32
    scf.if %2 {
      %cst_15 = arith.constant 0.000000e+00 : f32
      %34 = vector.broadcast %cst_15 : f32 to vector<1x256xf32>
      %c0_16 = arith.constant 0 : index
      %c0_17 = arith.constant 0 : index
      %35 = vector.load %arg6[%c0_16, %c0_17] : memref<1x256xf32, #tpu.memory_space<vmem>>, vector<1x256xf32>
      tpu.vector_store %arg6[%c0_16, %c0_17], %34 {strides = array<i32>} : memref<1x256xf32, #tpu.memory_space<vmem>>, vector<1x256xf32>,
    } else {
    }
    %c0 = arith.constant 0 : index
    %c0_1 = arith.constant 0 : index
    %c0_2 = arith.constant 0 : index
    %3 = vector.load %arg3[%c0, %c0_1, %c0_2] : memref<1x4x256xf32, #tpu.memory_space<vmem>>, vector<1x4x256xf32>
    %4 = vector.shape_cast %3 : vector<1x4x256xf32> to vector<4x256xf32>
    %c0_3 = arith.constant 0 : index
    %c0_4 = arith.constant 0 : index
    %c0_5 = arith.constant 0 : index
    %5 = vector.load %arg4[%c0_3, %c0_4, %c0_5] : memref<1x1x256xi32, #tpu.memory_space<vmem>>, vector<1x1x256xi32>
    %6 = vector.shape_cast %5 : vector<1x1x256xi32> to vector<1x256xi32>
    %7 = tpu.iota {dimensions = array<i32: 0>} : vector<4x256xi32>
    %8 = vector.broadcast %6 : vector<1x256xi32> to vector<4x256xi32>
    %9 = arith.cmpi eq, %7, %8 : vector<4x256xi32>
    %10 = arith.extui %9 : vector<4x256xi1> to vector<4x256xi32>
    %11 = arith.sitofp %10 : vector<4x256xi32> to vector<4x256xf32>
    %12 = arith.mulf %11, %4 : vector<4x256xf32>
    %cst = arith.constant dense<0.000000e+00> : vector<256xf32>
    %13 = vector.multi_reduction <add>, %12, %cst [0] : vector<4x256xf32> to vector<256xf32>
    %14 = vector.shape_cast %13 : vector<256xf32> to vector<1x256xf32>
    %15 = tpu.iota {dimensions = array<i32: 1>} : vector<1x256xi32>
    %c1_i32 = arith.constant 1 : i32
    %16 = arith.muli %arg1, %c1_i32 : i32
    %17 = arith.addi %16, %arg2 : i32
    %c256_i32 = arith.constant 256 : i32
    %18 = arith.muli %17, %c256_i32 : i32
    %19 = vector.broadcast %18 : i32 to vector<1x256xi32>
    %20 = arith.addi %19, %15 : vector<1x256xi32>
    %c256_i32_6 = arith.constant 256 : i32
    %21 = vector.broadcast %c256_i32_6 : i32 to vector<1x256xi32>
    %22 = arith.cmpi slt, %20, %21 : vector<1x256xi32>
    %cst_7 = arith.constant 1.000000e+00 : f32
    %23 = vector.broadcast %cst_7 : f32 to vector<1x256xf32>
    %24 = arith.select %22, %14, %23 : vector<1x256xi1>, vector<1x256xf32>
    %25 = math.log %24 : vector<1x256xf32>
    %cst_8 = arith.constant 0.000000e+00 : f32
    %26 = vector.broadcast %cst_8 : f32 to vector<1x256xf32>
    %27 = arith.subf %26, %25 : vector<1x256xf32>
    %c0_9 = arith.constant 0 : index
    %c0_10 = arith.constant 0 : index
    %28 = vector.load %arg6[%c0_9, %c0_10] : memref<1x256xf32, #tpu.memory_space<vmem>>, vector<1x256xf32>
    %29 = arith.addf %28, %27 : vector<1x256xf32>
    %c0_11 = arith.constant 0 : index
    %c0_12 = arith.constant 0 : index
    %30 = vector.load %arg6[%c0_11, %c0_12] : memref<1x256xf32, #tpu.memory_space<vmem>>, vector<1x256xf32>
    tpu.vector_store %arg6[%c0_11, %c0_12], %29 {strides = array<i32>} : memref<1x256xf32, #tpu.memory_space<vmem>>, vector<1x256xf32>,
    %c0_i32_13 = arith.constant 0 : i32
    %31 = arith.cmpi eq, %arg2, %c0_i32_13 : i32
    %32 = arith.extui %31 : i1 to i32
    %c0_i32_14 = arith.constant 0 : i32
    %33 = arith.cmpi ne, %32, %c0_i32_14 : i32
    scf.if %33 {
      %c0_15 = arith.constant 0 : index
      %c0_16 = arith.constant 0 : index
      %34 = vector.load %arg6[%c0_15, %c0_16] : memref<1x256xf32, #tpu.memory_space<vmem>>, vector<1x256xf32>
      %c0_17 = arith.constant 0 : index
      %c0_18 = arith.constant 0 : index
      %c0_19 = arith.constant 0 : index
      %35 = vector.load %arg5[%c0_17, %c0_18, %c0_19] : memref<1x1x256xf32, #tpu.memory_space<vmem>>, vector<1x1x256xf32>
      %36 = vector.shape_cast %35 : vector<1x1x256xf32> to vector<1x256xf32>
      %37 = vector.shape_cast %34 : vector<1x256xf32> to vector<1x1x256xf32>
      tpu.vector_store %arg5[%c0_17, %c0_18, %c0_19], %37 {strides = array<i32>} : memref<1x1x256xf32, #tpu.memory_space<vmem>>, vector<1x1x256xf32>,
    } else {
    }
    return
  }
  func.func @transform_0(%arg0: i32, %arg1: i32, %arg2: i32) -> (i32, i32, i32) {
    %c1_i32 = arith.constant 1 : i32
    %0 = arith.muli %arg1, %c1_i32 : i32
    %1 = arith.addi %0, %arg2 : i32
    %c0_i32 = arith.constant 0 : i32
    %c0_i32_0 = arith.constant 0 : i32
    return %arg0, %c0_i32, %1 : i32, i32, i32
  }
  func.func @transform_1(%arg0: i32, %arg1: i32, %arg2: i32) -> (i32, i32, i32) {
    %c1_i32 = arith.constant 1 : i32
    %0 = arith.muli %arg1, %c1_i32 : i32
    %1 = arith.addi %0, %arg2 : i32
    %c0_i32 = arith.constant 0 : i32
    %c0_i32_0 = arith.constant 0 : i32
    return %arg0, %c0_i32, %1 : i32, i32, i32
  }
  func.func @transform_2(%arg0: i32, %arg1: i32, %arg2: i32) -> (i32, i32, i32) {
    %c0_i32 = arith.constant 0 : i32
    %c0_i32_0 = arith.constant 0 : i32
    return %arg0, %arg1, %c0_i32 : i32, i32, i32
  }
}

</mosaic_0001>

<llo_original>
// kernel: cross_entropy_loss_2d.1
$region0: #{cross_entropy_loss_2d.1}
  #allocation0 [shape = 'u32[]', space=smem, size = 0x4, offset = 0x4, fixed_abs, tag = 'smem constant byte address 0x4 - core index']
  #allocation1 [shape = 'u32[144,128]{1,0:T(1,128)}', space=vmem, size = 0x12000, scoped, tag = 'internal scratch']
  #allocation2 [shape = 'f32[1,256]{1,0:T(1,128)}', space=vmem, size = 0x400, scoped, tag = 'scratch operand']
  %s0 = inlined_call_operand.vmem [shape: f32[2,4,256], index: 0, kind: input, shape index: {}]
  %s1 = inlined_call_operand.vmem [shape: s32[2,1,256], index: 1, kind: input, shape index: {}]
  %s2 = inlined_call_operand.vmem [shape: f32[2,1,256], index: 2, kind: output, shape index: {}]
  %s3 = sld [smem:[#allocation0]]
  $region49: #{cross_entropy_loss_2d.1} parent=0
    _
  %s5 = ssub.s32 1, %s3
  %s6 = scalar_select 0, %s5, %s3
  loop: start=0, step=1, limit=4
  $region2: #{cross_entropy_loss_2d.1} parent=0 // loop_pre_header
    _
  $region3: #{cross_entropy_loss_2d.1} parent=0 // loop_header
    %s8 = sphi 0, %s12
    %p9 = scmp.ge.s32.totalorder %s8, 4
    %s15 = sphi 0, %s34
    %s16 = sphi 0, %s30
    %s17 = sphi 0, %s26
    %s18 = sphi 0, %s15
    %s19 = sphi 0, %s16
    %s20 = sphi 0, %s17
    %s21 = sphi 0, %s18
    %s22 = sphi 0, %s19
    %s23 = sphi 0, %s20
    %s41 = sphi 0, %s43
    %s44 = sphi 0, %s41
    %s45 = sphi 0, %s44
    %s61 = sphi 0, %s45
    %s71 = sphi 0, %s73
    %s74 = sphi 0, %s71
    %s75 = sphi 0, %s74
    %s91 = sphi 0, %s75
    %s99 = sphi 0, %s101
    %s102 = sphi 0, %s99
    %s103 = sphi 0, %s102
    %s119 = sphi 0, %s103
  $region4: #{cross_entropy_loss_2d.1} parent=0 // loop_header_branch
    %11 = sbr.rel (%p9) target = $region8
  $region5: #{cross_entropy_loss_2d.1} parent=0 // loop_body
    %s13 = ssub.s32 %s8, 1
    %s14 = ssub.s32 %s8, 2
    %s24 = sadd.s32 1, %s17
    %p25 = scmp.ge.s32.totalorder %s24, 1
    %s26 = scalar_select %p25, 0, %s24
    %s27 = sadd.s32 1, %s16
    %s28 = scalar_select %p25, %s27, %s16
    %p29 = scmp.ge.s32.totalorder %s28, 1
    %s30 = scalar_select %p29, 0, %s28
    %s31 = sadd.s32 1, %s15
    %s32 = scalar_select %p29, %s31, %s15
    %p33 = scmp.ge.s32.totalorder %s32, 2
    %s34 = scalar_select %p33, 0, %s32
    %s35 = sadd.s32 %s16, %s17
    %s36 = sadd.s32 %s30, %s26
    %s37 = ssub.s32 %s15, %s34
    %s38 = ssub.s32 %s35, %s36
    %s39 = sor.u32 %s37, %s38
    %p40 = scmp.eq.s32.totalorder %s39, 0
    %s42 = sadd.s32 %s41, 1
    %s43 = scalar_select %p40, %s41, %s42
    %p46 = pneg %p40
    %p47 = scmp.eq.s32.totalorder %s8, 1
    %p48 = por %p46, %p47
    %p49 = scmp.ne.s32.totalorder %s41, %s44
    %p50 = scmp.eq.s32.totalorder %s8, 0
    %p51 = por %p49, %p50
    %p52 = scmp.ne.s32.totalorder %s41, %s44
    %p53 = scmp.eq.s32.totalorder %s13, 1
    %p54 = por %p52, %p53
    %p55 = scmp.ne.s32.totalorder %s44, %s45
    %p56 = scmp.eq.s32.totalorder %s13, 0
    %p57 = por %p55, %p56
    %p58 = scmp.ne.s32.totalorder %s44, %s45
    %p59 = scmp.eq.s32.totalorder %s14, 1
    %p60 = por %p58, %p59
    %p62 = scmp.ne.s32.totalorder %s45, %s61
    %p63 = scmp.eq.s32.totalorder %s14, 0
    %p64 = por %p62, %p63
    %s65 = sadd.s32 %s16, %s17
    %s66 = sadd.s32 %s30, %s26
    %s67 = ssub.s32 %s15, %s34
    %s68 = ssub.s32 %s65, %s66
    %s69 = sor.u32 %s67, %s68
    %p70 = scmp.eq.s32.totalorder %s69, 0
    %s72 = sadd.s32 %s71, 1
    %s73 = scalar_select %p70, %s71, %s72
    %p76 = pneg %p70
    %p77 = scmp.eq.s32.totalorder %s8, 1
    %p78 = por %p76, %p77
    %p79 = scmp.ne.s32.totalorder %s71, %s74
    %p80 = scmp.eq.s32.totalorder %s8, 0
    %p81 = por %p79, %p80
    %p82 = scmp.ne.s32.totalorder %s71, %s74
    %p83 = scmp.eq.s32.totalorder %s13, 1
    %p84 = por %p82, %p83
    %p85 = scmp.ne.s32.totalorder %s74, %s75
    %p86 = scmp.eq.s32.totalorder %s13, 0
    %p87 = por %p85, %p86
    %p88 = scmp.ne.s32.totalorder %s74, %s75
    %p89 = scmp.eq.s32.totalorder %s14, 1
    %p90 = por %p88, %p89
    %p92 = scmp.ne.s32.totalorder %s75, %s91
    %p93 = scmp.eq.s32.totalorder %s14, 0
    %p94 = por %p92, %p93
    %s95 = ssub.s32 %s15, %s34
    %s96 = ssub.s32 %s16, %s30
    %s97 = sor.u32 %s95, %s96
    %p98 = scmp.eq.s32.totalorder %s97, 0
    %s100 = sadd.s32 %s99, 1
    %s101 = scalar_select %p98, %s99, %s100
    %p104 = pneg %p98
    %p105 = scmp.eq.s32.totalorder %s8, 1
    %p106 = por %p104, %p105
    %p107 = scmp.ne.s32.totalorder %s99, %s102
    %p108 = scmp.eq.s32.totalorder %s8, 0
    %p109 = por %p107, %p108
    %p110 = scmp.ne.s32.totalorder %s99, %s102
    %p111 = scmp.eq.s32.totalorder %s13, 1
    %p112 = por %p110, %p111
    %p113 = scmp.ne.s32.totalorder %s102, %s103
    %p114 = scmp.eq.s32.totalorder %s13, 0
    %p115 = por %p113, %p114
    %p116 = scmp.ne.s32.totalorder %s102, %s103
    %p117 = scmp.eq.s32.totalorder %s14, 1
    %p118 = por %p116, %p117
    %p120 = scmp.ne.s32.totalorder %s103, %s119
    %p121 = scmp.eq.s32.totalorder %s14, 0
    %p122 = por %p120, %p121
    %p123 = scmp.le.s32.totalorder 1, %s8
    %p124 = scmp.lt.s32.totalorder %s8, 3
    %p125 = pnand %p123, %p124
    %p126 = pneg %p125
    // Predicated region
    $region9: #{cross_entropy_loss_2d.1} parent=5 // pred_check
      _
    $region10: #{cross_entropy_loss_2d.1} parent=5 // pred_check_branch
      %128 = sbr.rel (%p125) target = $region12
    $region11: #{cross_entropy_loss_2d.1} parent=5 // pred_region
      %s129 = ssub.s32 %s8, 1
    $region12: #{cross_entropy_loss_2d.1} parent=5 // pred_fallthru
      _
    %p130 = scmp.lt.s32.totalorder %s8, 2
    // Predicated region
    $region13: #{cross_entropy_loss_2d.1} parent=5 // pred_check
      %p131 = pneg %p130
    $region14: #{cross_entropy_loss_2d.1} parent=5 // pred_check_branch
      %133 = sbr.rel (%p131) target = $region16
    $region15: #{cross_entropy_loss_2d.1} parent=5 // pred_region
      // Predicated region
      $region17: #{cross_entropy_loss_2d.1} parent=15 // pred_check
        %p134 = pneg %p51
      $region18: #{cross_entropy_loss_2d.1} parent=15 // pred_check_branch
        %136 = sbr.rel (%p134) target = $region20
      $region19: #{cross_entropy_loss_2d.1} parent=15 // pred_region
        %s137 = sadd.s32 %s16, %s17
        %s138 = smul.u32 2, %s137
        %p139 = scmp.lt.s32.totalorder %s15, 1
        %s140 = scalar_select %p139, %s15, 1
        %p141 = scmp.lt.s32.totalorder %s138, 1
        %s142 = scalar_select %p141, %s138, 1
        %s143 = smul.addr %s140, 2
        %s144 = sadd.s32 %s142, %s143
        %s145 = smul.addr %s144, 4
        %s146 = scalar_lea.vmem %s0, %s145
        %s147 = sadd.s32 %s16, %s17
        %s148 = smul.u32 2, %s147
      $region20: #{cross_entropy_loss_2d.1} parent=15 // pred_fallthru
        _
      // Predicated region
      $region21: #{cross_entropy_loss_2d.1} parent=15 // pred_check
        %p149 = pneg %p81
      $region22: #{cross_entropy_loss_2d.1} parent=15 // pred_check_branch
        %151 = sbr.rel (%p149) target = $region24
      $region23: #{cross_entropy_loss_2d.1} parent=15 // pred_region
        %s152 = sadd.s32 %s16, %s17
        %s153 = smul.u32 2, %s152
        %p154 = scmp.lt.s32.totalorder %s15, 1
        %s155 = scalar_select %p154, %s15, 1
        %p156 = scmp.lt.s32.totalorder %s153, 1
        %s157 = scalar_select %p156, %s153, 1
        %s158 = smul.addr %s155, 2
        %s159 = sadd.s32 %s157, %s158
        %s160 = scalar_lea.vmem %s1, %s159
        %s161 = sadd.s32 %s16, %s17
        %s162 = smul.u32 2, %s161
      $region24: #{cross_entropy_loss_2d.1} parent=15 // pred_fallthru
        _
    $region16: #{cross_entropy_loss_2d.1} parent=5 // pred_fallthru
      _
    %p163 = scmp.le.s32.totalorder 1, %s8
    %p164 = scmp.lt.s32.totalorder %s8, 3
    %p165 = pnand %p163, %p164
    %p166 = pneg %p165
    // Predicated region
    $region25: #{cross_entropy_loss_2d.1} parent=5 // pred_check
      _
    $region26: #{cross_entropy_loss_2d.1} parent=5 // pred_check_branch
      %168 = sbr.rel (%p165) target = $region28
    $region27: #{cross_entropy_loss_2d.1} parent=5 // pred_region
      %s169 = ssub.s32 %s8, 1
      %s170 = sadd.s32 %s19, %s20
      %s171 = smul.u32 2, %s170
      %p172 = scmp.lt.s32.totalorder %s18, 1
      %s173 = scalar_select %p172, %s18, 1
      %p174 = scmp.lt.s32.totalorder %s171, 1
      %s175 = scalar_select %p174, %s171, 1
      %s176 = smul.addr %s173, 2
      %s177 = sadd.s32 %s175, %s176
      %s178 = smul.addr %s177, 4
      %s179 = scalar_lea.vmem %s0, %s178
      %p180 = pneg %p57
      %p181 = pneg %p54
      %s182 = sadd.s32 %s19, %s20
      %s183 = smul.u32 2, %s182
      %p184 = scmp.lt.s32.totalorder %s18, 1
      %s185 = scalar_select %p184, %s18, 1
      %p186 = scmp.lt.s32.totalorder %s183, 1
      %s187 = scalar_select %p186, %s183, 1
      %s188 = smul.addr %s185, 2
      %s189 = sadd.s32 %s187, %s188
      %s190 = scalar_lea.vmem %s1, %s189
      %p191 = pneg %p87
      %p192 = pneg %p84
      %p193 = pneg %p115
      %p194 = pneg %p112
      %p195 = scmp.lt.s32.totalorder %s18, 1
      %s196 = scalar_select %p195, %s18, 1
      %p197 = scmp.lt.s32.totalorder %s19, 0
      %s198 = scalar_select %p197, %s19, 0
      %s199 = smul.addr %s198, 2
      %s200 = smul.addr %s196, 2
      %s201 = sadd.s32 %s199, %s200
      %s202 = scalar_lea.vmem %s2, %s201
      %s203 = sadd.s32 %s19, %s20
      %s204 = smul.u32 2, %s203
      %p205 = scmp.lt.s32.totalorder %s18, 1
      %s206 = scalar_select %p205, %s18, 1
      %p207 = scmp.lt.s32.totalorder %s204, 1
      %s208 = scalar_select %p207, %s204, 1
      %s209 = smul.addr %s206, 2
      %s210 = sadd.s32 %s208, %s209
      %s211 = smul.addr %s210, 4
      %s212 = scalar_lea.vmem %s0, %s211
      %s213 = sadd.s32 %s19, %s20
      %s214 = smul.u32 2, %s213
      %s215 = sadd.s32 %s19, %s20
      %s216 = smul.u32 2, %s215
      %p217 = scmp.lt.s32.totalorder %s18, 1
      %s218 = scalar_select %p217, %s18, 1
      %p219 = scmp.lt.s32.totalorder %s216, 1
      %s220 = scalar_select %p219, %s216, 1
      %s221 = smul.addr %s218, 2
      %s222 = sadd.s32 %s220, %s221
      %s223 = scalar_lea.vmem %s1, %s222
      %s224 = sadd.s32 %s19, %s20
      %s225 = smul.u32 2, %s224
      %p226 = scmp.lt.s32.totalorder %s18, 1
      %s227 = scalar_select %p226, %s18, 1
      %p228 = scmp.lt.s32.totalorder %s19, 0
      %s229 = scalar_select %p228, %s19, 0
      %s230 = smul.addr %s229, 2
      %s231 = smul.addr %s227, 2
      %s232 = sadd.s32 %s230, %s231
      %s233 = scalar_lea.vmem %s2, %s232
      %p234 = scmp.eq.s32.totalorder %s20, 0
      // Predicated region
      $region29: #{cross_entropy_loss_2d.1} parent=27 // pred_check
        %p235 = pneg %p234
      $region30: #{cross_entropy_loss_2d.1} parent=27 // pred_check_branch
        %237 = sbr.rel (%p235) target = $region32
      $region31: #{cross_entropy_loss_2d.1} parent=27 // pred_region
        %v238 = vlaneseq
        %vm239 = vcmp.ge.s32.totalorder %v238, 0
        %vm240 = vcmp.lt.s32.totalorder %v238, 256
        %vm241 = vmand %vm239, %vm240
        %242 = vst.msk [vmem:[#allocation2] sm:$0x3] %vm241, 0.0
      $region32: #{cross_entropy_loss_2d.1} parent=27 // pred_fallthru
        _
      %v243 = vld [vmem:[%s212] sm:$0xff]
      %v244 = vld [vmem:[%s223] sm:$0x3]
      %v245 = vlaneseq
      %v246 = vshrl.u32 %v245, 7
      %v247 = vlaneseq
      %v248 = vshrl.u32 %v247, 7
      %v249 = vsub.s32 0, %v248
      %v250 = vrot.slane %v244, %v249
      %v251 = vlaneseq
      %v252 = vshrl.u32 %v251, 7
      %v253 = vsub.s32 1, %v252
      %v254 = vrot.slane %v244, %v253
      %vm255 = vcmp.eq.s32.totalorder %v246, %v250
      %vm256 = vcmp.eq.s32.totalorder %v246, %v254
      %v257 = vsel %vm255, 1, 0
      %v258 = vsel %vm256, 1, 0
      %v259 = vcvt.s32.f32 %v257
      %v260 = vcvt.s32.f32 %v258
      %v262 = vcombine.high %v243, %v243
      %v264 = vmul.f32 %v259, %v243
      %v265 = vmul.f32 %v260, %v262
      %vm266 = vcmask 1043456
      %v267 = vsel %vm266, %v264, 0.0
      %v268 = vrot.slane %v267, 4
      %v269 = vadd.f32 %v267, %v268
      %v270 = vrot.slane %v269, 2
      %v271 = vadd.f32 %v269, %v270
      %v272 = vrot.slane %v271, 1
      %v273 = vadd.f32 %v271, %v272
      %v274 = vsel %vm266, %v265, 0.0
      %v275 = vrot.slane %v274, 4
      %v276 = vadd.f32 %v274, %v275
      %v277 = vrot.slane %v276, 2
      %v278 = vadd.f32 %v276, %v277
      %v279 = vrot.slane %v278, 1
      %v280 = vadd.f32 %v278, %v279
      %v281 = vlaneseq
      %v282 = vand.u32 %v281, 127
      %v283 = vadd.s32 %v282, 128
      %s284 = sadd.s32 %s19, %s20
      %s285 = smul.u32 %s284, 256
      %v286 = vstv %s285
      %v287 = vadd.s32 %v286, %v282
      %v288 = vadd.s32 %v286, %v283
      %vm289 = vcmp.lt.s32.totalorder %v287, 256
      %vm290 = vcmp.lt.s32.totalorder %v288, 256
      %v291 = vsel %vm289, %v273, 1.0
      %v292 = vsel %vm290, %v280, 1.0
      %v293 = vlog2.pop %v291
      %v294 = vmul.f32 %v293, 0.6931472
      %v295 = vlog2.pop %v292
      %v296 = vmul.f32 %v295, 0.6931472
      %v297 = vsub.f32 0.0, %v294
      %v298 = vsub.f32 0.0, %v296
      %v299 = vld [vmem:[#allocation2] sm:$0x3]
      %v302 = vcombine.low %v297, %v298
      %v304 = vunpack.c.l.s4 1966171168
      %v305 = vunpack.c.0.s8 %v304
      %v306 = vlaneseq
      %v307 = vshrl.u32 %v306, 7
      %v308 = vsub.s32 %v305, %v307
      %v309 = vrot.slane %v302, %v308
      %v311 = vunpack.c.l.s4 1966171168
      %v312 = vunpack.c.0.s8 %v311
      %v313 = vlaneseq
      %v314 = vshrl.u32 %v313, 7
      %v315 = vsub.s32 %v312, %v314
      %v316 = vrot.slane %v309, %v315
      %v318 = vadd.f32 %v299, %v316
      %v319 = vlaneseq
      %vm320 = vcmp.ge.s32.totalorder %v319, 0
      %vm321 = vcmp.lt.s32.totalorder %v319, 256
      %vm322 = vmand %vm320, %vm321
      %323 = vst.msk [vmem:[#allocation2] sm:$0x3] %vm322, %v318
      // Predicated region
      $region33: #{cross_entropy_loss_2d.1} parent=27 // pred_check
        %p324 = pneg %p234
      $region34: #{cross_entropy_loss_2d.1} parent=27 // pred_check_branch
        %326 = sbr.rel (%p324) target = $region36
      $region35: #{cross_entropy_loss_2d.1} parent=27 // pred_region
        %v327 = vld [vmem:[#allocation2] sm:$0x3]
        %328 = vst.msk [vmem:[%s233] sm:$0x3] %vm322, %v327
      $region36: #{cross_entropy_loss_2d.1} parent=27 // pred_fallthru
        _
      %p329 = scmp.lt.s32.totalorder %s18, 1
      %s330 = scalar_select %p329, %s18, 1
      %p331 = scmp.lt.s32.totalorder %s19, 0
      %s332 = scalar_select %p331, %s19, 0
      %s333 = smul.addr %s332, 2
      %s334 = smul.addr %s330, 2
      %s335 = sadd.s32 %s333, %s334
      %s336 = scalar_lea.vmem %s2, %s335
      // Predicated region
      $region37: #{cross_entropy_loss_2d.1} parent=27 // pred_check
        %p337 = pneg %p112
      $region38: #{cross_entropy_loss_2d.1} parent=27 // pred_check_branch
        %339 = sbr.rel (%p337) target = $region40
      $region39: #{cross_entropy_loss_2d.1} parent=27 // pred_region
        _
      $region40: #{cross_entropy_loss_2d.1} parent=27 // pred_fallthru
        _
    $region28: #{cross_entropy_loss_2d.1} parent=5 // pred_fallthru
      _
    %p340 = scmp.le.s32.totalorder 2, %s8
    // Predicated region
    $region41: #{cross_entropy_loss_2d.1} parent=5 // pred_check
      %p341 = pneg %p340
    $region42: #{cross_entropy_loss_2d.1} parent=5 // pred_check_branch
      %343 = sbr.rel (%p341) target = $region44
    $region43: #{cross_entropy_loss_2d.1} parent=5 // pred_region
      %s344 = ssub.s32 %s8, 2
      // Predicated region
      $region45: #{cross_entropy_loss_2d.1} parent=43 // pred_check
        %p345 = pneg %p118
      $region46: #{cross_entropy_loss_2d.1} parent=43 // pred_check_branch
        %347 = sbr.rel (%p345) target = $region48
      $region47: #{cross_entropy_loss_2d.1} parent=43 // pred_region
        %p348 = scmp.lt.s32.totalorder %s21, 1
        %s349 = scalar_select %p348, %s21, 1
        %p350 = scmp.lt.s32.totalorder %s22, 0
        %s351 = scalar_select %p350, %s22, 0
        %s352 = smul.addr %s351, 2
        %s353 = smul.addr %s349, 2
        %s354 = sadd.s32 %s352, %s353
        %s355 = scalar_lea.vmem %s2, %s354
      $region48: #{cross_entropy_loss_2d.1} parent=43 // pred_fallthru
        _
    $region44: #{cross_entropy_loss_2d.1} parent=5 // pred_fallthru
      _
  $region6: #{cross_entropy_loss_2d.1} parent=0 // loop_footer
    %s12 = sadd.s32 1, %s8
  $region7: #{cross_entropy_loss_2d.1} parent=0 // loop_footer_branch
    %7 = sbr.rel target = $region3
  $region8: #{cross_entropy_loss_2d.1} parent=0 // loop_exit
    _

</llo_original>
